<compile_context>
chip_gen: v7x
topology: tpu7x:2x2x1
jax: 0.10.0
libtpu: 0.0.40
codegen_flags: <defaults>
</compile_context>

<pallas_src>
import functools

import jax
import jax.numpy as jnp
from jax.experimental import pallas as pl
from jax.experimental.pallas import tpu as pltpu


def _round_up(x, m):
    return ((x + m - 1) // m) * m


def _quadruplet_kernel(a_ref, p_ref, n1_ref, n2_ref, o_ref, acc_ref, *,
                       margin1, margin2, total_batch, block_b,
                       steps_per_core, needs_mask):
    c = pl.program_id(0)          # core-split axis ("parallel")
    i = pl.program_id(1)          # batch-scan axis ("arbitrary")

    @pl.when(i == 0)
    def _():
        acc_ref[...] = jnp.zeros_like(acc_ref)

    a = a_ref[...].astype(jnp.float32)
    p = p_ref[...].astype(jnp.float32)
    n1 = n1_ref[...].astype(jnp.float32)
    n2 = n2_ref[...].astype(jnp.float32)

    # (x1 - x2).pow(2).sum(1): per-row squared euclidean distances, kept 2-D.
    d_ap = a - p
    d_an = a - n1
    d_nn = n1 - n2
    d_pos = jnp.sum(d_ap * d_ap, axis=1, keepdims=True)     # (tb, 1)
    d_neg = jnp.sum(d_an * d_an, axis=1, keepdims=True)     # (tb, 1)
    d_negb = jnp.sum(d_nn * d_nn, axis=1, keepdims=True)    # (tb, 1)

    loss = (jnp.maximum(margin1 + d_pos - d_neg, 0.0)
            + jnp.maximum(margin2 + d_pos - d_negb, 0.0))   # (tb, 1)

    if needs_mask:
        # Mask rows past the true batch size (ragged tail / duplicated blocks
        # from the clamped index_map).  Statically skipped when blocks tile B
        # exactly and the steps split evenly across cores.
        step = c * steps_per_core + i
        row = step * block_b + jax.lax.broadcasted_iota(
            jnp.int32, (block_b, 1), 0)
        loss = jnp.where(row < total_batch, loss, 0.0)

    acc_ref[...] += loss

    @pl.when(i == steps_per_core - 1)
    def _():
        # One cross-sublane reduce per core; broadcast the per-core partial
        # into this core's (1, 8, 128) output slab (wrapper reads [c, 0, 0]).
        total = jnp.sum(acc_ref[...])
        o_ref[...] = jnp.full(o_ref.shape, total, jnp.float32)


def quadruplet_loss(anchor, positive, negative1, negative2,
                    margin1=2.0, margin2=1.0, block_b=None):
    """Pallas TPU implementation of QuadrupletLoss.forward (euclidean)."""
    B, D = anchor.shape
    itemsize = anchor.dtype.itemsize
    row_align = 16 if itemsize == 2 else 8    # bf16 sublane packing

    if block_b is None:
        # 4 input streams x 2 pipeline buffers x block_b x D x itemsize bytes,
        # sized against a conservative VMEM budget (works on v5e/v6e/v7x).
        vmem_budget = 24 * 1024 * 1024
        per_row = 4 * 2 * D * itemsize
        max_rows = max(row_align, vmem_budget // per_row)
        block_b = min(max_rows, _round_up(B, row_align), 4096)
    block_b = max(row_align, _round_up(block_b, row_align))

    steps_total = pl.cdiv(B, block_b)
    num_cores = 2 if steps_total >= 2 else 1      # 2-way split for v7x megacore
    steps_per_core = pl.cdiv(steps_total, num_cores)

    # Mask only needed if the last block is partial or the per-core step count
    # overshoots (duplicated, fully-masked tail steps).
    needs_mask = (B % block_b != 0) or (num_cores * steps_per_core != steps_total)

    def in_index_map(c, i):
        step = c * steps_per_core + i
        # Clamp so padded tail steps never DMA past the array; those rows are
        # masked out inside the kernel (and the repeated block is not re-DMA'd).
        return (jnp.minimum(step, steps_total - 1), 0)

    in_spec = pl.BlockSpec((block_b, D), in_index_map)
    out_spec = pl.BlockSpec((1, 8, 128), lambda c, i: (c, 0, 0))

    kernel = functools.partial(
        _quadruplet_kernel,
        margin1=float(margin1),        # static Python floats: no captured tracers
        margin2=float(margin2),
        total_batch=B,
        block_b=block_b,
        steps_per_core=steps_per_core,
        needs_mask=needs_mask,
    )

    cost = pl.CostEstimate(
        flops=12 * B * D,
        transcendentals=0,
        bytes_accessed=4 * B * D * itemsize + num_cores * 8 * 128 * 4,
    )

    partials = pl.pallas_call(
        kernel,
        out_shape=jax.ShapeDtypeStruct((num_cores, 8, 128), jnp.float32),
        grid_spec=pltpu.PrefetchScalarGridSpec(
            num_scalar_prefetch=0,
            grid=(num_cores, steps_per_core),
            in_specs=[in_spec, in_spec, in_spec, in_spec],
            out_specs=out_spec,
            scratch_shapes=[pltpu.VMEM((block_b, 1), jnp.float32)],
        ),
        compiler_params=pltpu.CompilerParams(
            dimension_semantics=("parallel", "arbitrary"),
            vmem_limit_bytes=40 * 1024 * 1024,
        ),
        cost_estimate=cost,
    )(anchor, positive, negative1, negative2)

    # Per-core partial sums live at [:, 0, 0]; final mean is a tiny XLA op.
    return jnp.sum(partials[:, 0, 0]) / jnp.float32(B)


def quadruplet_loss_ref(anchor, positive, negative1, negative2,
                        margin1=2.0, margin2=1.0):
    """Pure-JAX reference mirroring the PyTorch module."""
    d_pos = jnp.sum((anchor - positive) ** 2, axis=1)
    d_neg = jnp.sum((anchor - negative1) ** 2, axis=1)
    d_negb = jnp.sum((negative1 - negative2) ** 2, axis=1)
    loss = (jax.nn.relu(margin1 + d_pos - d_neg)
            + jax.nn.relu(margin2 + d_pos - d_negb))
    return jnp.mean(loss)


if __name__ == "__main__":
    # TODO(synk): cosine-similarity branch of the module not implemented
    # (only the default 'euclidean' path is exercised here).
    root = jax.random.PRNGKey(0)
    k1, k2 = jax.random.split(root)

    # Case 1: small, (8,128)-friendly shapes, single block (auto tile sizing).
    B, D = 16, 128
    ka, kp, kn1, kn2 = jax.random.split(k1, 4)
    anchor = jax.random.normal(ka, (B, D), dtype=jnp.float32)
    positive = jax.random.normal(kp, (B, D), dtype=jnp.float32)
    negative1 = jax.random.normal(kn1, (B, D), dtype=jnp.float32)
    negative2 = jax.random.normal(kn2, (B, D), dtype=jnp.float32)

    out = jax.block_until_ready(
        quadruplet_loss(anchor, positive, negative1, negative2))
    ref = quadruplet_loss_ref(anchor, positive, negative1, negative2)
    assert jnp.allclose(out, ref, rtol=1e-5, atol=1e-5), (out, ref)

    # Case 2: ragged batch + multi-block + 2-way core-split + clamped tail.
    B2 = 20
    kb = jax.random.split(k2, 4)
    a2 = jax.random.normal(kb[0], (B2, D), dtype=jnp.float32)
    p2 = jax.random.normal(kb[1], (B2, D), dtype=jnp.float32)
    n12 = jax.random.normal(kb[2], (B2, D), dtype=jnp.float32)
    n22 = jax.random.normal(kb[3], (B2, D), dtype=jnp.float32)

    out2 = jax.block_until_ready(quadruplet_loss(a2, p2, n12, n22, block_b=8))
    ref2 = quadruplet_loss_ref(a2, p2, n12, n22)
    assert jnp.allclose(out2, ref2, rtol=1e-5, atol=1e-5), (out2, ref2)

    print("KERNEL_OK")
</pallas_src>

<mosaic_0001>
module attributes {stable_mosaic.version = 11 : i64} {
  func.func @_quadruplet_kernel(%arg0: i32, %arg1: i32, %arg2: memref<16x128xf32, #tpu.memory_space<vmem>>, %arg3: memref<16x128xf32, #tpu.memory_space<vmem>>, %arg4: memref<16x128xf32, #tpu.memory_space<vmem>>, %arg5: memref<16x128xf32, #tpu.memory_space<vmem>>, %arg6: memref<1x8x128xf32, #tpu.memory_space<vmem>>, %arg7: memref<16x1xf32, #tpu.memory_space<vmem>>) attributes {dimension_semantics = [#tpu.dimension_semantics<parallel>, #tpu.dimension_semantics<arbitrary>], iteration_bounds = array<i64: 1, 1>, scalar_prefetch = 0 : i64, scratch_operands = 1 : i64, tpu.core_type = #tpu.core_type<tc>, window_params = [{transform_indices = @transform_0, window_bounds = array<i64: 16, 128>}, {transform_indices = @transform_1, window_bounds = array<i64: 16, 128>}, {transform_indices = @transform_2, window_bounds = array<i64: 16, 128>}, {transform_indices = @transform_3, window_bounds = array<i64: 16, 128>}, {transform_indices = @transform_4, window_bounds = array<i64: 1, 8, 128>}]} {
    %c0_i32 = arith.constant 0 : i32
    %0 = arith.cmpi eq, %arg1, %c0_i32 : i32
    %1 = arith.extui %0 : i1 to i32
    %c0_i32_0 = arith.constant 0 : i32
    %2 = arith.cmpi ne, %1, %c0_i32_0 : i32
    scf.if %2 {
      %cst_20 = arith.constant 0.000000e+00 : f32
      %36 = vector.broadcast %cst_20 : f32 to vector<16x1xf32>
      %c0_21 = arith.constant 0 : index
      %c0_22 = arith.constant 0 : index
      %37 = vector.load %arg7[%c0_21, %c0_22] : memref<16x1xf32, #tpu.memory_space<vmem>>, vector<16x1xf32>
      tpu.vector_store %arg7[%c0_21, %c0_22], %36 {strides = array<i32>} : memref<16x1xf32, #tpu.memory_space<vmem>>, vector<16x1xf32>,
    } else {
    }
    %c0 = arith.constant 0 : index
    %c0_1 = arith.constant 0 : index
    %3 = vector.load %arg2[%c0, %c0_1] : memref<16x128xf32, #tpu.memory_space<vmem>>, vector<16x128xf32>
    %c0_2 = arith.constant 0 : index
    %c0_3 = arith.constant 0 : index
    %4 = vector.load %arg3[%c0_2, %c0_3] : memref<16x128xf32, #tpu.memory_space<vmem>>, vector<16x128xf32>
    %c0_4 = arith.constant 0 : index
    %c0_5 = arith.constant 0 : index
    %5 = vector.load %arg4[%c0_4, %c0_5] : memref<16x128xf32, #tpu.memory_space<vmem>>, vector<16x128xf32>
    %c0_6 = arith.constant 0 : index
    %c0_7 = arith.constant 0 : index
    %6 = vector.load %arg5[%c0_6, %c0_7] : memref<16x128xf32, #tpu.memory_space<vmem>>, vector<16x128xf32>
    %7 = arith.subf %3, %4 : vector<16x128xf32>
    %8 = arith.subf %3, %5 : vector<16x128xf32>
    %9 = arith.subf %5, %6 : vector<16x128xf32>
    %10 = arith.mulf %7, %7 : vector<16x128xf32>
    %cst = arith.constant dense<0.000000e+00> : vector<16xf32>
    %11 = vector.multi_reduction <add>, %10, %cst [1] : vector<16x128xf32> to vector<16xf32>
    %12 = vector.shape_cast %11 : vector<16xf32> to vector<16x1xf32>
    %13 = arith.mulf %8, %8 : vector<16x128xf32>
    %cst_8 = arith.constant dense<0.000000e+00> : vector<16xf32>
    %14 = vector.multi_reduction <add>, %13, %cst_8 [1] : vector<16x128xf32> to vector<16xf32>
    %15 = vector.shape_cast %14 : vector<16xf32> to vector<16x1xf32>
    %16 = arith.mulf %9, %9 : vector<16x128xf32>
    %cst_9 = arith.constant dense<0.000000e+00> : vector<16xf32>
    %17 = vector.multi_reduction <add>, %16, %cst_9 [1] : vector<16x128xf32> to vector<16xf32>
    %18 = vector.shape_cast %17 : vector<16xf32> to vector<16x1xf32>
    %cst_10 = arith.constant 2.000000e+00 : f32
    %19 = vector.broadcast %cst_10 : f32 to vector<16x1xf32>
    %20 = arith.addf %19, %12 : vector<16x1xf32>
    %21 = arith.subf %20, %15 : vector<16x1xf32>
    %cst_11 = arith.constant 0.000000e+00 : f32
    %22 = vector.broadcast %cst_11 : f32 to vector<16x1xf32>
    %23 = arith.maximumf %21, %22 : vector<16x1xf32>
    %cst_12 = arith.constant 1.000000e+00 : f32
    %24 = vector.broadcast %cst_12 : f32 to vector<16x1xf32>
    %25 = arith.addf %24, %12 : vector<16x1xf32>
    %26 = arith.subf %25, %18 : vector<16x1xf32>
    %cst_13 = arith.constant 0.000000e+00 : f32
    %27 = vector.broadcast %cst_13 : f32 to vector<16x1xf32>
    %28 = arith.maximumf %26, %27 : vector<16x1xf32>
    %29 = arith.addf %23, %28 : vector<16x1xf32>
    %c0_14 = arith.constant 0 : index
    %c0_15 = arith.constant 0 : index
    %30 = vector.load %arg7[%c0_14, %c0_15] : memref<16x1xf32, #tpu.memory_space<vmem>>, vector<16x1xf32>
    %31 = arith.addf %30, %29 : vector<16x1xf32>
    %c0_16 = arith.constant 0 : index
    %c0_17 = arith.constant 0 : index
    %32 = vector.load %arg7[%c0_16, %c0_17] : memref<16x1xf32, #tpu.memory_space<vmem>>, vector<16x1xf32>
    tpu.vector_store %arg7[%c0_16, %c0_17], %31 {strides = array<i32>} : memref<16x1xf32, #tpu.memory_space<vmem>>, vector<16x1xf32>,
    %c0_i32_18 = arith.constant 0 : i32
    %33 = arith.cmpi eq, %arg1, %c0_i32_18 : i32
    %34 = arith.extui %33 : i1 to i32
    %c0_i32_19 = arith.constant 0 : i32
    %35 = arith.cmpi ne, %34, %c0_i32_19 : i32
    scf.if %35 {
      %c0_20 = arith.constant 0 : index
      %c0_21 = arith.constant 0 : index
      %36 = vector.load %arg7[%c0_20, %c0_21] : memref<16x1xf32, #tpu.memory_space<vmem>>, vector<16x1xf32>
      %37 = vector.shape_cast %36 : vector<16x1xf32> to vector<1x16x1xf32>
      %cst_22 = arith.constant dense<0.000000e+00> : vector<1xf32>
      %38 = vector.multi_reduction <add>, %37, %cst_22 [1, 2] : vector<1x16x1xf32> to vector<1xf32>
      %39 = vector.shape_cast %38 : vector<1xf32> to vector<1x1x1xf32>
      %40 = vector.extract %39[0, 0, 0] : f32 from vector<1x1x1xf32>
      %41 = vector.broadcast %40 : f32 to vector<1x8x128xf32>
      %c0_23 = arith.constant 0 : index
      %c0_24 = arith.constant 0 : index
      %c0_25 = arith.constant 0 : index
      %42 = vector.load %arg6[%c0_23, %c0_24, %c0_25] : memref<1x8x128xf32, #tpu.memory_space<vmem>>, vector<1x8x128xf32>
      tpu.vector_store %arg6[%c0_23, %c0_24, %c0_25], %41 {strides = array<i32>} : memref<1x8x128xf32, #tpu.memory_space<vmem>>, vector<1x8x128xf32>,
    } else {
    }
    return
  }
  func.func @transform_0(%arg0: i32, %arg1: i32) -> (i32, i32) {
    %c1_i32 = arith.constant 1 : i32
    %0 = arith.muli %arg0, %c1_i32 : i32
    %1 = arith.addi %0, %arg1 : i32
    %c0_i32 = arith.constant 0 : i32
    %2 = arith.minsi %1, %c0_i32 : i32
    %c0_i32_0 = arith.constant 0 : i32
    %c0_i32_1 = arith.constant 0 : i32
    return %2, %c0_i32_0 : i32, i32
  }
  func.func @transform_1(%arg0: i32, %arg1: i32) -> (i32, i32) {
    %c1_i32 = arith.constant 1 : i32
    %0 = arith.muli %arg0, %c1_i32 : i32
    %1 = arith.addi %0, %arg1 : i32
    %c0_i32 = arith.constant 0 : i32
    %2 = arith.minsi %1, %c0_i32 : i32
    %c0_i32_0 = arith.constant 0 : i32
    %c0_i32_1 = arith.constant 0 : i32
    return %2, %c0_i32_0 : i32, i32
  }
  func.func @transform_2(%arg0: i32, %arg1: i32) -> (i32, i32) {
    %c1_i32 = arith.constant 1 : i32
    %0 = arith.muli %arg0, %c1_i32 : i32
    %1 = arith.addi %0, %arg1 : i32
    %c0_i32 = arith.constant 0 : i32
    %2 = arith.minsi %1, %c0_i32 : i32
    %c0_i32_0 = arith.constant 0 : i32
    %c0_i32_1 = arith.constant 0 : i32
    return %2, %c0_i32_0 : i32, i32
  }
  func.func @transform_3(%arg0: i32, %arg1: i32) -> (i32, i32) {
    %c1_i32 = arith.constant 1 : i32
    %0 = arith.muli %arg0, %c1_i32 : i32
    %1 = arith.addi %0, %arg1 : i32
    %c0_i32 = arith.constant 0 : i32
    %2 = arith.minsi %1, %c0_i32 : i32
    %c0_i32_0 = arith.constant 0 : i32
    %c0_i32_1 = arith.constant 0 : i32
    return %2, %c0_i32_0 : i32, i32
  }
  func.func @transform_4(%arg0: i32, %arg1: i32) -> (i32, i32, i32) {
    %c0_i32 = arith.constant 0 : i32
    %c0_i32_0 = arith.constant 0 : i32
    %c0_i32_1 = arith.constant 0 : i32
    return %arg0, %c0_i32, %c0_i32_0 : i32, i32, i32
  }
}

</mosaic_0001>

<llo_original>
// kernel: tpu_custom_call.1
$region0: #{tpu_custom_call.1}
  #allocation0 [shape = 'u32[]', space=smem, size = 0x4, offset = 0x4, fixed_abs, tag = 'smem constant byte address 0x4 - core index']
  #allocation1 [shape = 'u32[144,128]{1,0:T(1,128)}', space=vmem, size = 0x12000, scoped, tag = 'internal scratch']
  #allocation2 [shape = 'f32[16,1]{1,0:T(8,128)}', space=vmem, size = 0x2000, scoped, tag = 'scratch operand']
  %s0 = inlined_call_operand.hbm [shape: f32[16,128], index: 0, kind: input, shape index: {}]
  %s1 = inlined_call_operand.hbm [shape: f32[16,128], index: 1, kind: input, shape index: {}]
  %s2 = inlined_call_operand.hbm [shape: f32[16,128], index: 2, kind: input, shape index: {}]
  %s3 = inlined_call_operand.hbm [shape: f32[16,128], index: 3, kind: input, shape index: {}]
  %s4 = inlined_call_operand.hbm [shape: f32[1,8,128], index: 4, kind: output, shape index: {}]
  %s5 = sld [smem:[#allocation0]]
  $region50: #{tpu_custom_call.1} parent=0
    _
  %s7 = ssub.s32 1, %s5
  %s8 = scalar_select 0, %s7, %s5
  $region1: #{tpu_custom_call.1} parent=0
    #allocation3 [shape = 'u8[8192]{0}', space=vmem, size = 0x2000, scoped, tag = 'input window, operand 0, single buffered']
    #allocation4 [shape = 's32[1]{0}', space=sflag, size = 0x4, scoped, tag = 'scoped memory for tpu_custom_call.1']
    #allocation5 [shape = 's32[1]{0}', space=sflag, size = 0x4, scoped, tag = 'scoped memory for tpu_custom_call.1']
    #allocation6 [shape = 'u8[8192]{0}', space=vmem, size = 0x2000, scoped, tag = 'input window, operand 1, single buffered']
    #allocation7 [shape = 's32[1]{0}', space=sflag, size = 0x4, scoped, tag = 'scoped memory for tpu_custom_call.1']
    #allocation8 [shape = 'u8[8192]{0}', space=vmem, size = 0x2000, scoped, tag = 'input window, operand 2, single buffered']
    #allocation9 [shape = 'u8[8192]{0}', space=vmem, size = 0x2000, scoped, tag = 'input window, operand 3, single buffered']
    #allocation10 [shape = 's32[1]{0}', space=sflag, size = 0x4, scoped, tag = 'scoped memory for tpu_custom_call.1']
    #allocation11 [shape = 'u8[4096]{0}', space=vmem, size = 0x1000, scoped, tag = 'output window, operand 0, single buffered']
    %9 = vsyncpa [#allocation4], 0
    %10 = vsyncpa [#allocation7], 0
    %11 = vsyncpa [#allocation10], 0
    %12 = vsyncpa [#allocation5], 0
    // Predicated region
    $region2: #{tpu_custom_call.1} parent=1 // pred_check
      _
    $region3: #{tpu_custom_call.1} parent=1 // pred_check_branch
      %14 = sbr.rel (0) target = $region5
    $region4: #{tpu_custom_call.1} parent=1 // pred_region
      %s15 = sadd.s32 0, 0
      %p16 = scmp.lt.s32.totalorder %s15, 0
      %s17 = scalar_select %p16, %s15, 0
      %s18 = smul.u32 2, %s17
      %s20 = ssub.s32 256, 256
      %21 = vsyncadd [#allocation4], %s20
      %s22 = smul.addr %s18, 128
      %s23 = scalar_lea.hbm %s0, %s22
      %s24 = sshll.u32 [#allocation3], 4
      %s25 = int_to_ptr.vmem [resolvable:$true] %s24
      %30 = dma.hbm_to_vmem [thread:$0]  %s23, 256, %s25, [#allocation4], 128, 128, 8
    $region5: #{tpu_custom_call.1} parent=1 // pred_fallthru
      _
    // Predicated region
    $region6: #{tpu_custom_call.1} parent=1 // pred_check
      _
    $region7: #{tpu_custom_call.1} parent=1 // pred_check_branch
      %32 = sbr.rel (0) target = $region9
    $region8: #{tpu_custom_call.1} parent=1 // pred_region
      %s33 = sadd.s32 0, 0
      %p34 = scmp.lt.s32.totalorder %s33, 0
      %s35 = scalar_select %p34, %s33, 0
      %s36 = smul.u32 2, %s35
      %s38 = ssub.s32 256, 256
      %39 = vsyncadd [#allocation7], %s38
      %s40 = smul.addr %s36, 128
      %s41 = scalar_lea.hbm %s1, %s40
      %s42 = sshll.u32 [#allocation6], 4
      %s43 = int_to_ptr.vmem [resolvable:$true] %s42
      %48 = dma.hbm_to_vmem [thread:$0]  %s41, 256, %s43, [#allocation7], 128, 128, 8
    $region9: #{tpu_custom_call.1} parent=1 // pred_fallthru
      _
    // Predicated region
    $region10: #{tpu_custom_call.1} parent=1 // pred_check
      _
    $region11: #{tpu_custom_call.1} parent=1 // pred_check_branch
      %50 = sbr.rel (0) target = $region13
    $region12: #{tpu_custom_call.1} parent=1 // pred_region
      %s51 = sadd.s32 0, 0
      %p52 = scmp.lt.s32.totalorder %s51, 0
      %s53 = scalar_select %p52, %s51, 0
      %s54 = smul.u32 2, %s53
      %s56 = ssub.s32 256, 256
      %57 = vsyncadd [#allocation7], %s56
      %s58 = smul.addr %s54, 128
      %s59 = scalar_lea.hbm %s2, %s58
      %s60 = sshll.u32 [#allocation8], 4
      %s61 = int_to_ptr.vmem [resolvable:$true] %s60
      %66 = dma.hbm_to_vmem [thread:$0]  %s59, 256, %s61, [#allocation7], 128, 128, 8
    $region13: #{tpu_custom_call.1} parent=1 // pred_fallthru
      _
    // Predicated region
    $region14: #{tpu_custom_call.1} parent=1 // pred_check
      _
    $region15: #{tpu_custom_call.1} parent=1 // pred_check_branch
      %68 = sbr.rel (0) target = $region17
    $region16: #{tpu_custom_call.1} parent=1 // pred_region
      %s69 = sadd.s32 0, 0
      %p70 = scmp.lt.s32.totalorder %s69, 0
      %s71 = scalar_select %p70, %s69, 0
      %s72 = smul.u32 2, %s71
      %s74 = ssub.s32 256, 256
      %75 = vsyncadd [#allocation10], %s74
      %s76 = smul.addr %s72, 128
      %s77 = scalar_lea.hbm %s3, %s76
      %s78 = sshll.u32 [#allocation9], 4
      %s79 = int_to_ptr.vmem [resolvable:$true] %s78
      %84 = dma.hbm_to_vmem [thread:$0]  %s77, 256, %s79, [#allocation10], 128, 128, 8
    $region17: #{tpu_custom_call.1} parent=1 // pred_fallthru
      _
    // Predicated region
    $region18: #{tpu_custom_call.1} parent=1 // pred_check
      _
    $region19: #{tpu_custom_call.1} parent=1 // pred_check_branch
      %86 = sbr.rel (0) target = $region21
    $region20: #{tpu_custom_call.1} parent=1 // pred_region
      %87 = dma.done [#allocation4], 256
    $region21: #{tpu_custom_call.1} parent=1 // pred_fallthru
      _
    // Predicated region
    $region22: #{tpu_custom_call.1} parent=1 // pred_check
      _
    $region23: #{tpu_custom_call.1} parent=1 // pred_check_branch
      %89 = sbr.rel (0) target = $region25
    $region24: #{tpu_custom_call.1} parent=1 // pred_region
      %90 = dma.done [#allocation7], 256
    $region25: #{tpu_custom_call.1} parent=1 // pred_fallthru
      _
    // Predicated region
    $region26: #{tpu_custom_call.1} parent=1 // pred_check
      _
    $region27: #{tpu_custom_call.1} parent=1 // pred_check_branch
      %92 = sbr.rel (0) target = $region29
    $region28: #{tpu_custom_call.1} parent=1 // pred_region
      %93 = dma.done [#allocation7], 256
    $region29: #{tpu_custom_call.1} parent=1 // pred_fallthru
      _
    // Predicated region
    $region30: #{tpu_custom_call.1} parent=1 // pred_check
      _
    $region31: #{tpu_custom_call.1} parent=1 // pred_check_branch
      %95 = sbr.rel (0) target = $region33
    $region32: #{tpu_custom_call.1} parent=1 // pred_region
      %96 = dma.done [#allocation10], 256
    $region33: #{tpu_custom_call.1} parent=1 // pred_fallthru
      _
    %s97 = sadd.s32 0, 0
    %p98 = scmp.lt.s32.totalorder %s97, 0
    %s99 = scalar_select %p98, %s97, 0
    %s100 = smul.u32 2, %s99
    %s101 = sadd.s32 0, 0
    %p102 = scmp.lt.s32.totalorder %s101, 0
    %s103 = scalar_select %p102, %s101, 0
    %s104 = smul.u32 2, %s103
    %s105 = sadd.s32 0, 0
    %p106 = scmp.lt.s32.totalorder %s105, 0
    %s107 = scalar_select %p106, %s105, 0
    %s108 = smul.u32 2, %s107
    %s109 = sadd.s32 0, 0
    %p110 = scmp.lt.s32.totalorder %s109, 0
    %s111 = scalar_select %p110, %s109, 0
    %s112 = smul.u32 2, %s111
    %p113 = scmp.eq.s32.totalorder 0, 0
    // Predicated region
    $region34: #{tpu_custom_call.1} parent=1 // pred_check
      %p114 = pneg %p113
    $region35: #{tpu_custom_call.1} parent=1 // pred_check_branch
      %116 = sbr.rel (%p114) target = $region37
    $region36: #{tpu_custom_call.1} parent=1 // pred_region
      %vm117 = vcmask 7168
      %118 = vst.msk [vmem:[#allocation2] sm:$0xff] %vm117, 0.0
      %119 = vst.msk [vmem:[#allocation2 + $0x8] sm:$0xff] %vm117, 0.0
    $region37: #{tpu_custom_call.1} parent=1 // pred_fallthru
      _
    %v120 = vld [vmem:[#allocation3] sm:$0xff]
    %v121 = vld [vmem:[#allocation3 + $0x8] sm:$0xff]
    %v122 = vld [vmem:[#allocation6] sm:$0xff]
    %v123 = vld [vmem:[#allocation6 + $0x8] sm:$0xff]
    %v124 = vld [vmem:[#allocation8] sm:$0xff]
    %v125 = vld [vmem:[#allocation8 + $0x8] sm:$0xff]
    %v126 = vld [vmem:[#allocation9] sm:$0xff]
    %v127 = vld [vmem:[#allocation9 + $0x8] sm:$0xff]
    %v128 = vsub.f32 %v120, %v122
    %v129 = vsub.f32 %v121, %v123
    %v130 = vsub.f32 %v120, %v124
    %v131 = vsub.f32 %v121, %v125
    %v132 = vsub.f32 %v124, %v126
    %v133 = vsub.f32 %v125, %v127
    %v134 = vmul.f32 %v128, %v128
    %v135 = vmul.f32 %v129, %v129
    %136 = vadd.xlane.f32.xlu0 %v134
    %v137 = vpop.xlane.xlu0 %136
    %138 = vadd.xlane.f32.xlu0 %v135
    %v139 = vpop.xlane.xlu0 %138
    %v140 = vmul.f32 %v130, %v130
    %v141 = vmul.f32 %v131, %v131
    %142 = vadd.xlane.f32.xlu0 %v140
    %v143 = vpop.xlane.xlu0 %142
    %144 = vadd.xlane.f32.xlu0 %v141
    %v145 = vpop.xlane.xlu0 %144
    %v146 = vmul.f32 %v132, %v132
    %v147 = vmul.f32 %v133, %v133
    %148 = vadd.xlane.f32.xlu0 %v146
    %v149 = vpop.xlane.xlu0 %148
    %150 = vadd.xlane.f32.xlu0 %v147
    %v151 = vpop.xlane.xlu0 %150
    %v152 = vadd.f32 %v137, 2.0
    %v153 = vadd.f32 %v139, 2.0
    %v154 = vsub.f32 %v152, %v143
    %v155 = vsub.f32 %v153, %v145
    %v156 = vmax.f32 %v154, 0.0
    %v157 = vmax.f32 %v155, 0.0
    %v158 = vadd.f32 %v137, 1.0
    %v159 = vadd.f32 %v139, 1.0
    %v160 = vsub.f32 %v158, %v149
    %v161 = vsub.f32 %v159, %v151
    %v162 = vmax.f32 %v160, 0.0
    %v163 = vmax.f32 %v161, 0.0
    %v164 = vadd.f32 %v156, %v162
    %v165 = vadd.f32 %v157, %v163
    %v166 = vld [vmem:[#allocation2] sm:$0xff]
    %v167 = vld [vmem:[#allocation2 + $0x8] sm:$0xff]
    %v168 = vadd.f32 %v166, %v164
    %v169 = vadd.f32 %v167, %v165
    %vm170 = vcmask 7168
    %171 = vst.msk [vmem:[#allocation2] sm:$0xff] %vm170, %v168
    %172 = vst.msk [vmem:[#allocation2 + $0x8] sm:$0xff] %vm170, %v169
    // Predicated region
    $region38: #{tpu_custom_call.1} parent=1 // pred_check
      %p173 = pneg %p113
    $region39: #{tpu_custom_call.1} parent=1 // pred_check_branch
      %175 = sbr.rel (%p173) target = $region41
    $region40: #{tpu_custom_call.1} parent=1 // pred_region
      %v176 = vld [vmem:[#allocation2] sm:$0xff]
      %v177 = vld [vmem:[#allocation2 + $0x8] sm:$0xff]
      %v178 = vsel %vm170, %v176, 0.0
      %v179 = vsel %vm170, %v177, 0.0
      %v180 = vadd.f32 %v178, %v179
      %181 = vadd.xlane.f32.xlu0 %v180
      %v182 = vpop.xlane.xlu0 %181
      %v183 = vrot.slane %v182, 4
      %v184 = vadd.f32 %v182, %v183
      %v185 = vrot.slane %v184, 2
      %v186 = vadd.f32 %v184, %v185
      %v187 = vrot.slane %v186, 1
      %v188 = vadd.f32 %v186, %v187
      %s189 = vtos %v188
      %v190 = vstv %s189
      %191 = vst [vmem:[#allocation11] sm:$0xff] %v190
    $region41: #{tpu_custom_call.1} parent=1 // pred_fallthru
      _
    // Predicated region
    $region42: #{tpu_custom_call.1} parent=1 // pred_check
      _
    $region43: #{tpu_custom_call.1} parent=1 // pred_check_branch
      %193 = sbr.rel (0) target = $region45
    $region44: #{tpu_custom_call.1} parent=1 // pred_region
      %s195 = ssub.s32 128, 128
      %196 = vsyncadd [#allocation5], %s195
      %s198 = sshll.u32 [#allocation11], 4
      %s199 = int_to_ptr.vmem [resolvable:$true] %s198
      %201 = dma.vmem_to_hbm [thread:$0]  %s199, 128, %s4, [#allocation5]
    $region45: #{tpu_custom_call.1} parent=1 // pred_fallthru
      _
    // Predicated region
    $region46: #{tpu_custom_call.1} parent=1 // pred_check
      _
    $region47: #{tpu_custom_call.1} parent=1 // pred_check_branch
      %203 = sbr.rel (0) target = $region49
    $region48: #{tpu_custom_call.1} parent=1 // pred_region
      %204 = dma.done [#allocation5], 128
    $region49: #{tpu_custom_call.1} parent=1 // pred_fallthru
      _
    %205 = vsyncpa [#allocation4], 1
    %206 = vsyncpa [#allocation7], 1
    %207 = vsyncpa [#allocation10], 1
    %208 = vsyncpa [#allocation5], 1

</llo_original>
